<compile_context>
chip_gen: v5e
topology: v5e:2x2
jax: 0.10.0
libtpu: 0.0.40
codegen_flags: <defaults>
</compile_context>

<pallas_src>
import functools

import jax
import jax.numpy as jnp
import numpy as np
from jax import lax
from jax.experimental import pallas as pl
from jax.experimental.pallas import tpu as pltpu


def _warp_kernel(ddf_ref, img_ref, out_ref, *, C, H, W, T):
    """One (batch, target-tile) grid step.

    ddf_ref: (1, 2, T)     displacement for this tile: [d_row, d_col]
    img_ref: (1, C*H, W)   image for this batch element, (C, H) flattened to rows
    out_ref: (1, C, T)     warped image tile
    """
    f32 = jnp.float32

    # Reconstruct the reference grid for this tile of flattened target pixels:
    #   flat pixel id p = program_id(1) * T + lane ;  row = p // W ;  col = p % W
    # Done in f32 (exact for p < 2^24).
    base = (pl.program_id(1) * T).astype(f32)
    lane = lax.broadcasted_iota(jnp.int32, (1, T), 1).astype(f32)     # (1, T)
    flat = lane + base
    row = jnp.floor(flat / f32(W))
    col = flat - row * f32(W)

    # Absolute sampling coordinates in pixels.
    y = row + ddf_ref[0, 0:1, :].astype(f32)                          # (1, T)
    x = col + ddf_ref[0, 1:2, :].astype(f32)                          # (1, T)

    # Separable tent-function bilinear factors (zeros padding is implicit: any
    # out-of-range corner has weight exactly 0 for every in-range index).
    hh = lax.broadcasted_iota(jnp.int32, (H, T), 0).astype(f32)       # (H, T)
    ww = lax.broadcasted_iota(jnp.int32, (W, T), 0).astype(f32)       # (W, T)
    Wy = jnp.maximum(1.0 - jnp.abs(hh - y), 0.0)                      # (H, T)
    Wx = jnp.maximum(1.0 - jnp.abs(ww - x), 0.0)                      # (W, T)

    # Stage 1 (MXU): contract over W with a fat M = C*H.
    img = img_ref[0, :, :].astype(f32)                                # (C*H, W)
    tmp = jnp.dot(img, Wx, preferred_element_type=f32)                # (C*H, T)

    # Stage 2 (VPU multiply + XLU sublane reduce): contract over H with Wy.
    out = jnp.sum(tmp.reshape(C, H, T) * Wy[None, :, :], axis=1)      # (C, T)

    out_ref[0, :, :] = out.astype(out_ref.dtype)


def _pick_tile(P):
    """Lane-aligned (multiple of 128) target tile with some grid depth for pipelining."""
    for t in (512, 256, 128):
        if P % t == 0 and P // t >= 2:
            return t
    for t in (512, 256, 128):
        if P % t == 0:
            return t
    return P  # tiny / odd spatial size: single full-extent block


def warp_pallas(image, ddf):
    """image: (B, C, H, W), ddf: (B, 2, H, W). Returns warped image (B, C, H, W)."""
    B, C, H, W = image.shape
    assert ddf.shape == (B, 2, H, W)
    P = H * W
    assert P < (1 << 24), "in-kernel f32 index math assumes H*W < 2^24"
    TILE_N = _pick_tile(P)
    num_tiles = P // TILE_N

    img_rows = image.reshape(B, C * H, W)    # contiguous reshape, no transpose
    ddf_flat = ddf.reshape(B, 2, P)          # contiguous reshape

    out = pl.pallas_call(
        functools.partial(_warp_kernel, C=C, H=H, W=W, T=TILE_N),
        out_shape=jax.ShapeDtypeStruct((B, C, P), image.dtype),
        grid=(B, num_tiles),
        in_specs=[
            pl.BlockSpec((1, 2, TILE_N), lambda b, n: (b, 0, n)),
            # Image block index is constant across the inner (tile) axis -> one DMA per batch.
            pl.BlockSpec((1, C * H, W), lambda b, n: (b, 0, 0)),
        ],
        out_specs=pl.BlockSpec((1, C, TILE_N), lambda b, n: (b, 0, n)),
        compiler_params=pltpu.CompilerParams(
            dimension_semantics=("parallel", "parallel"),
            vmem_limit_bytes=32 * 1024 * 1024,
        ),
    )(ddf_flat, img_rows)
    return out.reshape(B, C, H, W)


def warp_reference(image, ddf):
    """Pure-JAX reference: per-corner bilinear, zeros padding, align_corners=True."""
    B, C, H, W = image.shape
    ii = jnp.arange(H, dtype=ddf.dtype)[:, None]
    jj = jnp.arange(W, dtype=ddf.dtype)[None, :]
    y = ii + ddf[:, 0]                                  # (B, H, W)
    x = jj + ddf[:, 1]
    y0 = jnp.floor(y)
    x0 = jnp.floor(x)
    fy = y - y0
    fx = x - x0

    img_flat = image.reshape(B, C, H * W)
    out = jnp.zeros_like(image)
    for dy in (0, 1):
        for dx in (0, 1):
            yi = y0 + dy
            xi = x0 + dx
            wy = fy if dy else (1.0 - fy)
            wx = fx if dx else (1.0 - fx)
            w = wy * wx
            valid = (yi >= 0) & (yi <= H - 1) & (xi >= 0) & (xi <= W - 1)
            w = jnp.where(valid, w, 0.0)
            yc = jnp.clip(yi, 0, H - 1).astype(jnp.int32)
            xc = jnp.clip(xi, 0, W - 1).astype(jnp.int32)
            idx = (yc * W + xc).reshape(B, H * W)
            vals = jax.vmap(lambda f, i: f[:, i])(img_flat, idx)   # (B, C, H*W)
            out = out + vals.reshape(B, C, H, W) * w[:, None]
    return out


if __name__ == "__main__":
    key = jax.random.PRNGKey(0)
    k1, k2 = jax.random.split(key)
    B, C, H, W = 2, 4, 16, 16
    image = jax.random.normal(k1, (B, C, H, W), dtype=jnp.float32)
    # a few pixels of displacement, enough to exercise zeros padding at the borders
    ddf = jax.random.normal(k2, (B, 2, H, W), dtype=jnp.float32) * 3.0

    out = jax.block_until_ready(warp_pallas(image, ddf))
    ref = jax.block_until_ready(warp_reference(image, ddf))
    np.testing.assert_allclose(np.asarray(out), np.asarray(ref), rtol=1e-5, atol=1e-5)

    # TODO(synk): 3-D (spatial_dims=3) warp and mode>1 / border / reflection padding
    # paths of the original module are not implemented in this kernel.
    print("KERNEL_OK")
</pallas_src>

<mosaic_0001>
module attributes {stable_mosaic.version = 11 : i64} {
  func.func @_warp_kernel(%arg0: i32, %arg1: i32, %arg2: memref<1x2x128xf32, #tpu.memory_space<vmem>>, %arg3: memref<1x64x16xf32, #tpu.memory_space<vmem>>, %arg4: memref<1x4x128xf32, #tpu.memory_space<vmem>>) attributes {dimension_semantics = [#tpu.dimension_semantics<parallel>, #tpu.dimension_semantics<parallel>], iteration_bounds = array<i64: 2, 2>, scalar_prefetch = 0 : i64, scratch_operands = 0 : i64, tpu.core_type = #tpu.core_type<tc>, window_params = [{transform_indices = @transform_0, window_bounds = array<i64: 1, 2, 128>}, {transform_indices = @transform_1, window_bounds = array<i64: 1, 64, 16>}, {transform_indices = @transform_2, window_bounds = array<i64: 1, 4, 128>}]} {
    %c128_i32 = arith.constant 128 : i32
    %0 = arith.muli %arg1, %c128_i32 : i32
    %1 = arith.sitofp %0 : i32 to f32
    %2 = tpu.iota {dimensions = array<i32: 1>} : vector<1x128xi32>
    %3 = arith.sitofp %2 : vector<1x128xi32> to vector<1x128xf32>
    %4 = vector.broadcast %1 : f32 to vector<1x128xf32>
    %5 = arith.addf %3, %4 : vector<1x128xf32>
    %cst = arith.constant 1.600000e+01 : f32
    %6 = vector.broadcast %cst : f32 to vector<1x128xf32>
    %7 = arith.divf %5, %6 : vector<1x128xf32>
    %8 = math.floor %7 : vector<1x128xf32>
    %cst_0 = arith.constant 1.600000e+01 : f32
    %9 = vector.broadcast %cst_0 : f32 to vector<1x128xf32>
    %10 = arith.mulf %8, %9 : vector<1x128xf32>
    %11 = arith.subf %5, %10 : vector<1x128xf32>
    %c0 = arith.constant 0 : index
    %c0_1 = arith.constant 0 : index
    %c0_2 = arith.constant 0 : index
    %12 = vector.load %arg2[%c0, %c0_1, %c0_2] : memref<1x2x128xf32, #tpu.memory_space<vmem>>, vector<1x1x128xf32>
    %13 = vector.shape_cast %12 : vector<1x1x128xf32> to vector<1x128xf32>
    %14 = arith.addf %8, %13 : vector<1x128xf32>
    %c0_3 = arith.constant 0 : index
    %c1 = arith.constant 1 : index
    %c0_4 = arith.constant 0 : index
    %15 = vector.load %arg2[%c0_3, %c1, %c0_4] : memref<1x2x128xf32, #tpu.memory_space<vmem>>, vector<1x1x128xf32>
    %16 = vector.shape_cast %15 : vector<1x1x128xf32> to vector<1x128xf32>
    %17 = arith.addf %11, %16 : vector<1x128xf32>
    %18 = tpu.iota {dimensions = array<i32: 0>} : vector<16x128xi32>
    %19 = arith.sitofp %18 : vector<16x128xi32> to vector<16x128xf32>
    %20 = tpu.iota {dimensions = array<i32: 0>} : vector<16x128xi32>
    %21 = arith.sitofp %20 : vector<16x128xi32> to vector<16x128xf32>
    %22 = vector.broadcast %14 : vector<1x128xf32> to vector<16x128xf32>
    %23 = arith.subf %19, %22 : vector<16x128xf32>
    %24 = math.absf %23 : vector<16x128xf32>
    %cst_5 = arith.constant 1.000000e+00 : f32
    %25 = vector.broadcast %cst_5 : f32 to vector<16x128xf32>
    %26 = arith.subf %25, %24 : vector<16x128xf32>
    %cst_6 = arith.constant 0.000000e+00 : f32
    %27 = vector.broadcast %cst_6 : f32 to vector<16x128xf32>
    %28 = arith.maximumf %26, %27 : vector<16x128xf32>
    %29 = vector.broadcast %17 : vector<1x128xf32> to vector<16x128xf32>
    %30 = arith.subf %21, %29 : vector<16x128xf32>
    %31 = math.absf %30 : vector<16x128xf32>
    %cst_7 = arith.constant 1.000000e+00 : f32
    %32 = vector.broadcast %cst_7 : f32 to vector<16x128xf32>
    %33 = arith.subf %32, %31 : vector<16x128xf32>
    %cst_8 = arith.constant 0.000000e+00 : f32
    %34 = vector.broadcast %cst_8 : f32 to vector<16x128xf32>
    %35 = arith.maximumf %33, %34 : vector<16x128xf32>
    %c0_9 = arith.constant 0 : index
    %c0_10 = arith.constant 0 : index
    %c0_11 = arith.constant 0 : index
    %36 = vector.load %arg3[%c0_9, %c0_10, %c0_11] : memref<1x64x16xf32, #tpu.memory_space<vmem>>, vector<1x64x16xf32>
    %37 = vector.shape_cast %36 : vector<1x64x16xf32> to vector<64x16xf32>
    %cst_12 = arith.constant dense<0.000000e+00> : vector<64x128xf32>
    %38 = tpu.matmul %37, %35, %cst_12 {dimension_numbers = #tpu.dot_dimension_numbers<[1], [0], [0], [1], [0, 0, 1, 1], [], []>} : vector<64x16xf32>, vector<16x128xf32>, vector<64x128xf32> -> vector<64x128xf32>
    %39 = vector.shape_cast %38 : vector<64x128xf32> to vector<4x16x128xf32>
    %40 = vector.shape_cast %28 : vector<16x128xf32> to vector<1x16x128xf32>
    %41 = vector.broadcast %40 : vector<1x16x128xf32> to vector<4x16x128xf32>
    %42 = arith.mulf %39, %41 : vector<4x16x128xf32>
    %cst_13 = arith.constant dense<0.000000e+00> : vector<4x128xf32>
    %43 = vector.multi_reduction <add>, %42, %cst_13 [1] : vector<4x16x128xf32> to vector<4x128xf32>
    %c0_14 = arith.constant 0 : index
    %c0_15 = arith.constant 0 : index
    %c0_16 = arith.constant 0 : index
    %44 = vector.load %arg4[%c0_14, %c0_15, %c0_16] : memref<1x4x128xf32, #tpu.memory_space<vmem>>, vector<1x4x128xf32>
    %45 = vector.shape_cast %44 : vector<1x4x128xf32> to vector<4x128xf32>
    %46 = vector.shape_cast %43 : vector<4x128xf32> to vector<1x4x128xf32>
    tpu.vector_store %arg4[%c0_14, %c0_15, %c0_16], %46 {strides = array<i32>} : memref<1x4x128xf32, #tpu.memory_space<vmem>>, vector<1x4x128xf32>,
    return
  }
  func.func @transform_0(%arg0: i32, %arg1: i32) -> (i32, i32, i32) {
    %c0_i32 = arith.constant 0 : i32
    %c0_i32_0 = arith.constant 0 : i32
    return %arg0, %c0_i32, %arg1 : i32, i32, i32
  }
  func.func @transform_1(%arg0: i32, %arg1: i32) -> (i32, i32, i32) {
    %c0_i32 = arith.constant 0 : i32
    %c0_i32_0 = arith.constant 0 : i32
    %c0_i32_1 = arith.constant 0 : i32
    return %arg0, %c0_i32, %c0_i32_0 : i32, i32, i32
  }
  func.func @transform_2(%arg0: i32, %arg1: i32) -> (i32, i32, i32) {
    %c0_i32 = arith.constant 0 : i32
    %c0_i32_0 = arith.constant 0 : i32
    return %arg0, %c0_i32, %arg1 : i32, i32, i32
  }
}

</mosaic_0001>

<llo_original>
// kernel: tpu_custom_call.1
$region0: #{tpu_custom_call.1}
  #allocation0 [shape = 'u32[]', space=smem, size = 0x4, offset = 0x4, fixed_abs, tag = 'smem constant byte address 0x4 - core index']
  #allocation1 [shape = 'u32[72,128]{1,0:T(1,128)}', space=vmem, size = 0x9000, scoped, tag = 'internal scratch']
  %s0 = inlined_call_operand.vmem [shape: f32[2,2,256], index: 0, kind: input, shape index: {}]
  %s1 = inlined_call_operand.vmem [shape: f32[2,64,16], index: 1, kind: input, shape index: {}]
  %s2 = inlined_call_operand.hbm [shape: f32[2,4,256], index: 2, kind: output, shape index: {}]
  %s3 = sld [smem:[#allocation0]]
  $region41: #{tpu_custom_call.1} parent=0
    _
  %s5 = ssub.s32 1, %s3
  %s6 = scalar_select 0, %s5, %s3
  $region1: #{tpu_custom_call.1} parent=0
    #allocation2 [shape = 'u8[4096]{0}', space=vmem, size = 0x1000, scoped, tag = 'output window, operand 0']
    #allocation3 [shape = 's32[2]{0}', space=sflag, size = 0x8, scoped, tag = 'scoped memory for tpu_custom_call.1']
    %7 = vsyncpa [#allocation3], 0
    %s8 = scalar_lea.sflag [#allocation3], 1
    %9 = vsyncpa %s8, 0
    loop: start=0, step=1, limit=6
    $region2: #{tpu_custom_call.1} parent=1 // loop_pre_header
      _
    $region3: #{tpu_custom_call.1} parent=1 // loop_header
      %s11 = sphi 0, %s15
      %p12 = scmp.ge.s32.totalorder %s11, 6
      %s18 = sphi 0, %s30
      %s19 = sphi 0, %s26
      %s20 = sphi 0, %s18
      %s21 = sphi 0, %s19
      %s22 = sphi 0, %s20
      %s23 = sphi 0, %s21
      %s35 = sphi 0, %s37
      %s38 = sphi 0, %s35
      %s39 = sphi 0, %s38
      %s55 = sphi 0, %s39
      %s61 = sphi 0, %s63
      %s64 = sphi 0, %s61
      %s65 = sphi 0, %s64
      %s81 = sphi 0, %s65
      %s89 = sphi 0, %s91
      %s92 = sphi 0, %s89
      %s93 = sphi 0, %s92
      %s109 = sphi 0, %s93
    $region4: #{tpu_custom_call.1} parent=1 // loop_header_branch
      %14 = sbr.rel (%p12) target = $region8
    $region5: #{tpu_custom_call.1} parent=1 // loop_body
      %s16 = ssub.s32 %s11, 1
      %s17 = ssub.s32 %s11, 2
      %s24 = sadd.s32 1, %s19
      %p25 = scmp.ge.s32.totalorder %s24, 2
      %s26 = scalar_select %p25, 0, %s24
      %s27 = sadd.s32 1, %s18
      %s28 = scalar_select %p25, %s27, %s18
      %p29 = scmp.ge.s32.totalorder %s28, 2
      %s30 = scalar_select %p29, 0, %s28
      %s31 = ssub.s32 %s18, %s30
      %s32 = ssub.s32 %s19, %s26
      %s33 = sor.u32 %s31, %s32
      %p34 = scmp.eq.s32.totalorder %s33, 0
      %s36 = sadd.s32 %s35, 1
      %s37 = scalar_select %p34, %s35, %s36
      %p40 = pneg %p34
      %p41 = scmp.eq.s32.totalorder %s11, 3
      %p42 = por %p40, %p41
      %p43 = scmp.ne.s32.totalorder %s35, %s38
      %p44 = scmp.eq.s32.totalorder %s11, 0
      %p45 = por %p43, %p44
      %p46 = scmp.ne.s32.totalorder %s35, %s38
      %p47 = scmp.eq.s32.totalorder %s16, 3
      %p48 = por %p46, %p47
      %p49 = scmp.ne.s32.totalorder %s38, %s39
      %p50 = scmp.eq.s32.totalorder %s16, 0
      %p51 = por %p49, %p50
      %p52 = scmp.ne.s32.totalorder %s38, %s39
      %p53 = scmp.eq.s32.totalorder %s17, 3
      %p54 = por %p52, %p53
      %p56 = scmp.ne.s32.totalorder %s39, %s55
      %p57 = scmp.eq.s32.totalorder %s17, 0
      %p58 = por %p56, %p57
      %s59 = ssub.s32 %s18, %s30
      %p60 = scmp.eq.s32.totalorder %s59, 0
      %s62 = sadd.s32 %s61, 1
      %s63 = scalar_select %p60, %s61, %s62
      %p66 = pneg %p60
      %p67 = scmp.eq.s32.totalorder %s11, 3
      %p68 = por %p66, %p67
      %p69 = scmp.ne.s32.totalorder %s61, %s64
      %p70 = scmp.eq.s32.totalorder %s11, 0
      %p71 = por %p69, %p70
      %p72 = scmp.ne.s32.totalorder %s61, %s64
      %p73 = scmp.eq.s32.totalorder %s16, 3
      %p74 = por %p72, %p73
      %p75 = scmp.ne.s32.totalorder %s64, %s65
      %p76 = scmp.eq.s32.totalorder %s16, 0
      %p77 = por %p75, %p76
      %p78 = scmp.ne.s32.totalorder %s64, %s65
      %p79 = scmp.eq.s32.totalorder %s17, 3
      %p80 = por %p78, %p79
      %p82 = scmp.ne.s32.totalorder %s65, %s81
      %p83 = scmp.eq.s32.totalorder %s17, 0
      %p84 = por %p82, %p83
      %s85 = ssub.s32 %s18, %s30
      %s86 = ssub.s32 %s19, %s26
      %s87 = sor.u32 %s85, %s86
      %p88 = scmp.eq.s32.totalorder %s87, 0
      %s90 = sadd.s32 %s89, 1
      %s91 = scalar_select %p88, %s89, %s90
      %p94 = pneg %p88
      %p95 = scmp.eq.s32.totalorder %s11, 3
      %p96 = por %p94, %p95
      %p97 = scmp.ne.s32.totalorder %s89, %s92
      %p98 = scmp.eq.s32.totalorder %s11, 0
      %p99 = por %p97, %p98
      %p100 = scmp.ne.s32.totalorder %s89, %s92
      %p101 = scmp.eq.s32.totalorder %s16, 3
      %p102 = por %p100, %p101
      %p103 = scmp.ne.s32.totalorder %s92, %s93
      %p104 = scmp.eq.s32.totalorder %s16, 0
      %p105 = por %p103, %p104
      %p106 = scmp.ne.s32.totalorder %s92, %s93
      %p107 = scmp.eq.s32.totalorder %s17, 3
      %p108 = por %p106, %p107
      %p110 = scmp.ne.s32.totalorder %s93, %s109
      %p111 = scmp.eq.s32.totalorder %s17, 0
      %p112 = por %p110, %p111
      %p113 = scmp.le.s32.totalorder 1, %s11
      %p114 = scmp.lt.s32.totalorder %s11, 5
      %p115 = pnand %p113, %p114
      %p116 = pneg %p115
      // Predicated region
      $region9: #{tpu_custom_call.1} parent=5 // pred_check
        _
      $region10: #{tpu_custom_call.1} parent=5 // pred_check_branch
        %118 = sbr.rel (%p115) target = $region12
      $region11: #{tpu_custom_call.1} parent=5 // pred_region
        %s119 = ssub.s32 %s11, 1
      $region12: #{tpu_custom_call.1} parent=5 // pred_fallthru
        _
      %p120 = scmp.lt.s32.totalorder %s11, 4
      // Predicated region
      $region13: #{tpu_custom_call.1} parent=5 // pred_check
        %p121 = pneg %p120
      $region14: #{tpu_custom_call.1} parent=5 // pred_check_branch
        %123 = sbr.rel (%p121) target = $region16
      $region15: #{tpu_custom_call.1} parent=5 // pred_region
        // Predicated region
        $region17: #{tpu_custom_call.1} parent=15 // pred_check
          %p124 = pneg %p45
        $region18: #{tpu_custom_call.1} parent=15 // pred_check_branch
          %126 = sbr.rel (%p124) target = $region20
        $region19: #{tpu_custom_call.1} parent=15 // pred_region
          %p127 = scmp.lt.s32.totalorder %s18, 1
          %s128 = scalar_select %p127, %s18, 1
          %p129 = scmp.lt.s32.totalorder %s19, 1
          %s130 = scalar_select %p129, %s19, 1
          %s131 = smul.addr %s128, 2
          %s132 = sadd.s32 %s130, %s131
          %s133 = smul.addr %s132, 2
          %s134 = scalar_lea.vmem %s0, %s133
        $region20: #{tpu_custom_call.1} parent=15 // pred_fallthru
          _
        // Predicated region
        $region21: #{tpu_custom_call.1} parent=15 // pred_check
          %p135 = pneg %p71
        $region22: #{tpu_custom_call.1} parent=15 // pred_check_branch
          %137 = sbr.rel (%p135) target = $region24
        $region23: #{tpu_custom_call.1} parent=15 // pred_region
          %p138 = scmp.lt.s32.totalorder %s18, 1
          %s139 = scalar_select %p138, %s18, 1
          %s140 = smul.addr %s139, 8
          %s141 = smul.addr %s140, 8
          %s142 = scalar_lea.vmem %s1, %s141
        $region24: #{tpu_custom_call.1} parent=15 // pred_fallthru
          _
      $region16: #{tpu_custom_call.1} parent=5 // pred_fallthru
        _
      %p143 = scmp.le.s32.totalorder 1, %s11
      %p144 = scmp.lt.s32.totalorder %s11, 5
      %p145 = pnand %p143, %p144
      %p146 = pneg %p145
      // Predicated region
      $region25: #{tpu_custom_call.1} parent=5 // pred_check
        _
      $region26: #{tpu_custom_call.1} parent=5 // pred_check_branch
        %148 = sbr.rel (%p145) target = $region28
      $region27: #{tpu_custom_call.1} parent=5 // pred_region
        %s149 = ssub.s32 %s11, 1
        %p150 = scmp.lt.s32.totalorder %s20, 1
        %s151 = scalar_select %p150, %s20, 1
        %p152 = scmp.lt.s32.totalorder %s21, 1
        %s153 = scalar_select %p152, %s21, 1
        %s154 = smul.addr %s151, 2
        %s155 = sadd.s32 %s153, %s154
        %s156 = smul.addr %s155, 2
        %s157 = scalar_lea.vmem %s0, %s156
        %p158 = pneg %p51
        %p159 = pneg %p48
        %p160 = scmp.lt.s32.totalorder %s20, 1
        %s161 = scalar_select %p160, %s20, 1
        %s162 = smul.addr %s161, 8
        %s163 = smul.addr %s162, 8
        %s164 = scalar_lea.vmem %s1, %s163
        %p165 = pneg %p77
        %p166 = pneg %p74
        %p167 = pneg %p105
        %p168 = pneg %p102
        %s169 = sand.u32 %s92, 1
        %s170 = scalar_lea.sflag [#allocation3], %s169
        %s171 = sand.u32 %s92, 1
        %s172 = smul.addr %s171, 4
        %s173 = scalar_lea.vmem [#allocation2], %s172
        %p174 = scmp.lt.s32.totalorder %s20, 1
        %s175 = scalar_select %p174, %s20, 1
        %p176 = scmp.lt.s32.totalorder %s21, 1
        %s177 = scalar_select %p176, %s21, 1
        %s178 = smul.addr %s175, 2
        %s179 = sadd.s32 %s177, %s178
        %s180 = smul.addr %s179, 2
        %s181 = scalar_lea.vmem %s0, %s180
        %p182 = scmp.lt.s32.totalorder %s20, 1
        %s183 = scalar_select %p182, %s20, 1
        %s184 = smul.addr %s183, 8
        %s185 = smul.addr %s184, 8
        %s186 = scalar_lea.vmem %s1, %s185
        %s187 = smul.u32 %s21, 128
        %s188 = scvt.s32.f32 %s187
        %v189 = vlaneseq
        %v190 = vand.u32 %v189, 127
        %v191 = vcvt.s32.f32 %v190
        %v192 = vstv %s188
        %v193 = vadd.f32 %v191, %v192
        %v194 = vrcp.pop 16.0
        %v195 = vmul.f32 16.0, %v194
        %v196 = vsub.f32 1.0, %v195
        %v197 = vmul.f32 %v194, %v196
        %v198 = vadd.f32 %v194, %v197
        %vm199 = vweird.f32 %v194
        %v200 = vsel %vm199, %v194, %v198
        %v201 = vmul.f32 %v193, %v200
        %v202 = vfloor.f32 %v201
        %v203 = vmul.f32 %v202, 16.0
        %v204 = vsub.f32 %v193, %v203
        %v205 = vld [vmem:[%s181] sm:$0x1]
        %v206 = vadd.f32 %v202, %v205
        %v207 = vld [vmem:[%s181 + $0x1] sm:$0x1]
        %v208 = vadd.f32 %v204, %v207
        %v209 = vlaneseq
        %v210 = vshrl.u32 %v209, 7
        %v211 = vadd.s32 %v210, 8
        %v212 = vcvt.s32.f32 %v210
        %v213 = vcvt.s32.f32 %v211
        %v214 = vperm.slane %v206, 0
        %v215 = vsub.f32 %v212, %v214
        %v216 = vsub.f32 %v213, %v214
        %v217 = vand.u32 2147483647, %v215
        %v218 = vand.u32 2147483647, %v216
        %v219 = vsub.f32 1.0, %v217
        %v220 = vsub.f32 1.0, %v218
        %v221 = vmax.f32 %v219, 0.0
        %v222 = vmax.f32 %v220, 0.0
        %v223 = vperm.slane %v208, 0
        %v224 = vsub.f32 %v212, %v223
        %v225 = vsub.f32 %v213, %v223
        %v226 = vand.u32 2147483647, %v224
        %v227 = vand.u32 2147483647, %v225
        %v228 = vsub.f32 1.0, %v226
        %v229 = vsub.f32 1.0, %v227
        %v230 = vmax.f32 %v228, 0.0
        %v231 = vmax.f32 %v229, 0.0
        %v232 = vld [vmem:[%s186] sm:$0xff]
        %v233 = vld [vmem:[%s186 + $0x8] sm:$0xff]
        %v234 = vld [vmem:[%s186 + $0x10] sm:$0xff]
        %v235 = vld [vmem:[%s186 + $0x18] sm:$0xff]
        %v236 = vld [vmem:[%s186 + $0x20] sm:$0xff]
        %v237 = vld [vmem:[%s186 + $0x28] sm:$0xff]
        %v238 = vld [vmem:[%s186 + $0x30] sm:$0xff]
        %v239 = vld [vmem:[%s186 + $0x38] sm:$0xff]
        %vm240 = vcmask 130048
        %v242 = vsel %vm240, %v232, 0
        %v245 = vsel %vm240, %v233, 0
        %v248 = vsel %vm240, %v234, 0
        %v251 = vsel %vm240, %v235, 0
        %v254 = vsel %vm240, %v236, 0
        %v257 = vsel %vm240, %v237, 0
        %v260 = vsel %vm240, %v238, 0
        %v263 = vsel %vm240, %v239, 0
        %265 = vmatpush.msra.mxu0 0.0
        %266 = vmatpush.msra.mxu0 0.0
        %267 = vmatpush.msra.mxu0 0.0
        %268 = vmatpush.msra.mxu0 0.0
        %269 = vmatpush.msra.mxu0 0.0
        %270 = vmatpush.msra.mxu0 0.0
        %271 = vmatpush.msra.mxu0 0.0
        %272 = vmatpush.msra.mxu0 0.0
        %273 = vmatpush.msra.mxu0 0.0
        %274 = vmatpush.msra.mxu0 0.0
        %275 = vmatpush.msra.mxu0 0.0
        %276 = vmatpush.msra.mxu0 0.0
        %277 = vmatpush.msra.mxu0 0.0
        %278 = vmatpush.msra.mxu0 0.0
        %279 = vmatpush.msra.mxu0 %v231
        %280 = vmatpush.msra.mxu0 %v230
        %281 = vmatmul.f32.gmra.mxu0 %v242
        %v282 = vpop.f32.mrf.mxu0
        %v283 = vadd.f32 0.0, %v282
        %284 = vmatmul.f32.gmra.mxu0 %v245
        %v285 = vpop.f32.mrf.mxu0
        %v286 = vadd.f32 0.0, %v285
        %287 = vmatmul.f32.gmra.mxu0 %v248
        %v288 = vpop.f32.mrf.mxu0
        %v289 = vadd.f32 0.0, %v288
        %290 = vmatmul.f32.gmra.mxu0 %v251
        %v291 = vpop.f32.mrf.mxu0
        %v292 = vadd.f32 0.0, %v291
        %293 = vmatmul.f32.gmra.mxu0 %v254
        %v294 = vpop.f32.mrf.mxu0
        %v295 = vadd.f32 0.0, %v294
        %296 = vmatmul.f32.gmra.mxu0 %v257
        %v297 = vpop.f32.mrf.mxu0
        %v298 = vadd.f32 0.0, %v297
        %299 = vmatmul.f32.gmra.mxu0 %v260
        %v300 = vpop.f32.mrf.mxu0
        %v301 = vadd.f32 0.0, %v300
        %302 = vmatmul.f32.gmra.mxu0 %v263
        %v303 = vpop.f32.mrf.mxu0
        %v304 = vadd.f32 0.0, %v303
        %305 = vdwg.mxu0
        %v306 = vmul.f32 %v283, %v221
        %v307 = vmul.f32 %v286, %v222
        %v308 = vmul.f32 %v289, %v221
        %v309 = vmul.f32 %v292, %v222
        %v310 = vmul.f32 %v295, %v221
        %v311 = vmul.f32 %v298, %v222
        %v312 = vmul.f32 %v301, %v221
        %v313 = vmul.f32 %v304, %v222
        %v314 = vadd.f32 %v306, %v307
        %v315 = vrot.slane %v314, 4
        %v316 = vadd.f32 %v314, %v315
        %v317 = vrot.slane %v316, 2
        %v318 = vadd.f32 %v316, %v317
        %v319 = vrot.slane %v318, 1
        %v320 = vadd.f32 %v318, %v319
        %v321 = vadd.f32 %v308, %v309
        %v322 = vrot.slane %v321, 4
        %v323 = vadd.f32 %v321, %v322
        %v324 = vrot.slane %v323, 2
        %v325 = vadd.f32 %v323, %v324
        %v326 = vrot.slane %v325, 1
        %v327 = vadd.f32 %v325, %v326
        %v328 = vadd.f32 %v310, %v311
        %v329 = vrot.slane %v328, 4
        %v330 = vadd.f32 %v328, %v329
        %v331 = vrot.slane %v330, 2
        %v332 = vadd.f32 %v330, %v331
        %v333 = vrot.slane %v332, 1
        %v334 = vadd.f32 %v332, %v333
        %v335 = vadd.f32 %v312, %v313
        %v336 = vrot.slane %v335, 4
        %v337 = vadd.f32 %v335, %v336
        %v338 = vrot.slane %v337, 2
        %v339 = vadd.f32 %v337, %v338
        %v340 = vrot.slane %v339, 1
        %v341 = vadd.f32 %v339, %v340
        %vm346 = vcmask 1041409
        %v347 = vsel %vm346, %v327, %v320
        %vm348 = vcmask 1042434
        %v349 = vsel %vm348, %v334, %v347
        %vm350 = vcmask 1043459
        %v351 = vsel %vm350, %v341, %v349
        %353 = vst [vmem:[%s173] sm:$0xf] %v351
        %s354 = sand.u32 %s92, 1
        %s355 = scalar_lea.sflag [#allocation3], %s354
        %s356 = sand.u32 %s92, 1
        %s357 = smul.addr %s356, 4
        %s358 = scalar_lea.vmem [#allocation2], %s357
        // Predicated region
        $region29: #{tpu_custom_call.1} parent=27 // pred_check
          %p359 = pneg %p102
        $region30: #{tpu_custom_call.1} parent=27 // pred_check_branch
          %361 = sbr.rel (%p359) target = $region32
        $region31: #{tpu_custom_call.1} parent=27 // pred_region
          %363 = vsyncadd %s355, 0
          %s364 = smul.addr %s20, 2
          %s365 = sadd.s32 %s21, %s364
          %s366 = smul.addr %s365, 4
          %s367 = scalar_lea.hbm %s2, %s366
          %s369 = sshll.u32 %s358, 4
          %s370 = int_to_ptr.vmem [resolvable:$true] %s369
          %s371 = sshll.u32 %s367, 4
          %s372 = int_to_ptr.hbm [resolvable:$true] %s371
          %374 = dma.vmem_to_hbm [thread:$0]  %s370, 64, %s372, %s355
        $region32: #{tpu_custom_call.1} parent=27 // pred_fallthru
          _
      $region28: #{tpu_custom_call.1} parent=5 // pred_fallthru
        _
      %p375 = scmp.le.s32.totalorder 2, %s11
      // Predicated region
      $region33: #{tpu_custom_call.1} parent=5 // pred_check
        %p376 = pneg %p375
      $region34: #{tpu_custom_call.1} parent=5 // pred_check_branch
        %378 = sbr.rel (%p376) target = $region36
      $region35: #{tpu_custom_call.1} parent=5 // pred_region
        %s379 = ssub.s32 %s11, 2
        // Predicated region
        $region37: #{tpu_custom_call.1} parent=35 // pred_check
          %p380 = pneg %p108
        $region38: #{tpu_custom_call.1} parent=35 // pred_check_branch
          %382 = sbr.rel (%p380) target = $region40
        $region39: #{tpu_custom_call.1} parent=35 // pred_region
          %s383 = sand.u32 %s93, 1
          %s384 = scalar_lea.sflag [#allocation3], %s383
          %s385 = sand.u32 %s93, 1
          %s386 = smul.addr %s385, 4
          %s387 = scalar_lea.vmem [#allocation2], %s386
          %389 = dma.done %s384, 64
        $region40: #{tpu_custom_call.1} parent=35 // pred_fallthru
          _
      $region36: #{tpu_custom_call.1} parent=5 // pred_fallthru
        _
    $region6: #{tpu_custom_call.1} parent=1 // loop_footer
      %s15 = sadd.s32 1, %s11
    $region7: #{tpu_custom_call.1} parent=1 // loop_footer_branch
      %10 = sbr.rel target = $region3
    $region8: #{tpu_custom_call.1} parent=1 // loop_exit
      _
    %390 = vsyncpa [#allocation3], 1
    %s391 = scalar_lea.sflag [#allocation3], 1
    %392 = vsyncpa %s391, 1

</llo_original>
